<compile_context>
chip_gen: v5e
topology: v5e:2x2
jax: 0.10.0
libtpu: 0.0.40
codegen_flags: <defaults>
</compile_context>

<pallas_src>
import jax
import jax.numpy as jnp
from jax.experimental import pallas as pl
from jax.experimental.pallas import tpu as pltpu

# True layer dims.
DIMS = [161, 130, 100, 50, 25, 10, 1]
N_LAYERS = len(DIMS) - 1      # 6
D_PAD0 = 256                  # lane padding for layers 0-1 (161/130 inputs)
D_PAD1 = 128                  # lane padding for layers 2-5 (dims <= 100)
M_PAD = 8                     # sublane-aligned row count for the activation


def _mlp_kernel(x_ref, w01_ref, b01_ref, w25_ref, b25_ref, o_ref):
    """Whole MLP in one kernel invocation.

      x_ref   : (M_PAD, 256)   padded input activation (row 0 is real)
      w01_ref : (2, 256, 256)  zero-padded weights for layers 0, 1 (in, out)
      b01_ref : (2, 1, 256)    zero-padded biases for layers 0, 1
      w25_ref : (4, 128, 128)  zero-padded weights for layers 2..5
      b25_ref : (4, 1, 128)    zero-padded biases for layers 2..5
      o_ref   : (M_PAD, 128)   padded final activation (out[0, 0] is real)
    """
    h = x_ref[...]                                   # (8, 256)
    # Layers 0-1 at 256 lanes.
    for l in range(2):
        h = jnp.maximum(
            jnp.dot(h, w01_ref[l], preferred_element_type=jnp.float32)
            + b01_ref[l], 0.0)
    # Lanes 100..255 are exactly zero here (zero weight cols + zero bias +
    # ReLU), so slicing to 128 lanes is exact. 128 is a whole-vreg slice.
    h = h[:, :D_PAD1]                                # (8, 128)
    # Layers 2-5 at 128 lanes.
    for l in range(4):
        h = jnp.maximum(
            jnp.dot(h, w25_ref[l], preferred_element_type=jnp.float32)
            + b25_ref[l], 0.0)
    o_ref[...] = h


def prepare_params(params):
    """One-time prep: zero-pad each (in, out) weight / bias and stack into
    two slabs: (2,256,256)/(2,1,256) for layers 0-1 and (4,128,128)/(4,1,128)
    for layers 2-5.  Zero padding is exact: padded weight columns + zero bias
    keep padded activation lanes at exactly 0 through ReLU, and padded weight
    rows only ever multiply zero activation lanes."""
    w01, b01, w25, b25 = [], [], [], []
    for i, (w, b) in enumerate(params):
        fan_in, fan_out = DIMS[i], DIMS[i + 1]
        dp = D_PAD0 if i < 2 else D_PAD1
        w_p = jnp.zeros((dp, dp), jnp.float32).at[:fan_in, :fan_out].set(
            w.astype(jnp.float32))
        b_p = jnp.zeros((1, dp), jnp.float32).at[0, :fan_out].set(
            b.astype(jnp.float32))
        if i < 2:
            w01.append(w_p); b01.append(b_p)
        else:
            w25.append(w_p); b25.append(b_p)
    return (jnp.stack(w01), jnp.stack(b01),      # (2,256,256), (2,1,256)
            jnp.stack(w25), jnp.stack(b25))      # (4,128,128), (4,1,128)


@jax.jit
def mlp_forward(x, w01, b01, w25, b25):
    """x: any array with 161 elements (flattened, as in the PyTorch module).
    Returns array of shape (1, 1)."""
    x = jnp.reshape(x.astype(jnp.float32).flatten(), (1, DIMS[0]))
    # Pad rows 1 -> M_PAD and lanes 161 -> 256 with zeros.
    x_p = jnp.pad(x, ((0, M_PAD - 1), (0, D_PAD0 - DIMS[0])))

    out_p = pl.pallas_call(
        _mlp_kernel,
        out_shape=jax.ShapeDtypeStruct((M_PAD, D_PAD1), jnp.float32),
        # No grid: single invocation, every operand is a whole-array VMEM
        # block (total < 1 MiB resident).
    )(x_p, w01, b01, w25, b25)

    return out_p[:1, :DIMS[-1]]  # (1, 1)


def init_params(key):
    """Deterministic init matching nn.Linear's U(-1/sqrt(in), 1/sqrt(in)).
    Weights stored as (in, out) = transpose of PyTorch's (out, in)."""
    params = []
    for i in range(N_LAYERS):
        fan_in, fan_out = DIMS[i], DIMS[i + 1]
        key, kw, kb = jax.random.split(key, 3)
        bound = 1.0 / (fan_in ** 0.5)
        w = jax.random.uniform(kw, (fan_in, fan_out), jnp.float32,
                               minval=-bound, maxval=bound)
        b = jax.random.uniform(kb, (fan_out,), jnp.float32,
                               minval=-bound, maxval=bound)
        params.append((w, b))
    return params


def reference_forward(x, params):
    h = jnp.reshape(x.astype(jnp.float32).flatten(), (1, DIMS[0]))
    for w, b in params:
        h = jnp.maximum(h @ w + b[None, :], 0.0)  # ReLU after every layer
    return h


if __name__ == "__main__":
    key = jax.random.PRNGKey(0)
    key, kx = jax.random.split(key)
    # module flattens whatever it gets to (1, 161); feed 161 elements
    x = jax.random.normal(kx, (161,), jnp.float32)

    params = init_params(key)

    # one-time parameter prep (pad + stack), reused across forward calls
    w01, b01, w25, b25 = jax.block_until_ready(prepare_params(params))

    out = mlp_forward(x, w01, b01, w25, b25)
    out = jax.block_until_ready(out)

    ref = reference_forward(x, params)
    assert out.shape == (1, 1), out.shape
    assert jnp.allclose(out, ref, atol=1e-4, rtol=1e-4), (out, ref)

    print("KERNEL_OK")
</pallas_src>

<mosaic_0001>
module attributes {stable_mosaic.version = 11 : i64} {
  func.func @_mlp_kernel(%arg0: memref<8x256xf32, #tpu.memory_space<vmem>>, %arg1: memref<2x256x256xf32, #tpu.memory_space<vmem>>, %arg2: memref<2x1x256xf32, #tpu.memory_space<vmem>>, %arg3: memref<4x128x128xf32, #tpu.memory_space<vmem>>, %arg4: memref<4x1x128xf32, #tpu.memory_space<vmem>>, %arg5: memref<8x128xf32, #tpu.memory_space<vmem>>) attributes {dimension_semantics = [], scalar_prefetch = 0 : i64, scratch_operands = 0 : i64, tpu.core_type = #tpu.core_type<tc>} {
    %c0 = arith.constant 0 : index
    %c0_0 = arith.constant 0 : index
    %0 = vector.load %arg0[%c0, %c0_0] : memref<8x256xf32, #tpu.memory_space<vmem>>, vector<8x256xf32>
    %c0_1 = arith.constant 0 : index
    %c0_2 = arith.constant 0 : index
    %c0_3 = arith.constant 0 : index
    %1 = vector.load %arg1[%c0_1, %c0_2, %c0_3] : memref<2x256x256xf32, #tpu.memory_space<vmem>>, vector<1x256x256xf32>
    %2 = vector.shape_cast %1 : vector<1x256x256xf32> to vector<256x256xf32>
    %cst = arith.constant dense<0.000000e+00> : vector<8x256xf32>
    %3 = tpu.matmul %0, %2, %cst {dimension_numbers = #tpu.dot_dimension_numbers<[1], [0], [0], [1], [0, 0, 1, 1], [], []>} : vector<8x256xf32>, vector<256x256xf32>, vector<8x256xf32> -> vector<8x256xf32>
    %c0_4 = arith.constant 0 : index
    %c0_5 = arith.constant 0 : index
    %c0_6 = arith.constant 0 : index
    %4 = vector.load %arg2[%c0_4, %c0_5, %c0_6] : memref<2x1x256xf32, #tpu.memory_space<vmem>>, vector<1x1x256xf32>
    %5 = vector.shape_cast %4 : vector<1x1x256xf32> to vector<1x256xf32>
    %6 = vector.broadcast %5 : vector<1x256xf32> to vector<8x256xf32>
    %7 = arith.addf %3, %6 : vector<8x256xf32>
    %cst_7 = arith.constant 0.000000e+00 : f32
    %8 = vector.broadcast %cst_7 : f32 to vector<8x256xf32>
    %9 = arith.maximumf %7, %8 : vector<8x256xf32>
    %c1 = arith.constant 1 : index
    %c0_8 = arith.constant 0 : index
    %c0_9 = arith.constant 0 : index
    %10 = vector.load %arg1[%c1, %c0_8, %c0_9] : memref<2x256x256xf32, #tpu.memory_space<vmem>>, vector<1x256x256xf32>
    %11 = vector.shape_cast %10 : vector<1x256x256xf32> to vector<256x256xf32>
    %cst_10 = arith.constant dense<0.000000e+00> : vector<8x256xf32>
    %12 = tpu.matmul %9, %11, %cst_10 {dimension_numbers = #tpu.dot_dimension_numbers<[1], [0], [0], [1], [0, 0, 1, 1], [], []>} : vector<8x256xf32>, vector<256x256xf32>, vector<8x256xf32> -> vector<8x256xf32>
    %c1_11 = arith.constant 1 : index
    %c0_12 = arith.constant 0 : index
    %c0_13 = arith.constant 0 : index
    %13 = vector.load %arg2[%c1_11, %c0_12, %c0_13] : memref<2x1x256xf32, #tpu.memory_space<vmem>>, vector<1x1x256xf32>
    %14 = vector.shape_cast %13 : vector<1x1x256xf32> to vector<1x256xf32>
    %15 = vector.broadcast %14 : vector<1x256xf32> to vector<8x256xf32>
    %16 = arith.addf %12, %15 : vector<8x256xf32>
    %cst_14 = arith.constant 0.000000e+00 : f32
    %17 = vector.broadcast %cst_14 : f32 to vector<8x256xf32>
    %18 = arith.maximumf %16, %17 : vector<8x256xf32>
    %19 = vector.extract_strided_slice %18 {offsets = [0, 0], sizes = [8, 128], strides = [1, 1]} : vector<8x256xf32> to vector<8x128xf32>
    %c0_15 = arith.constant 0 : index
    %c0_16 = arith.constant 0 : index
    %c0_17 = arith.constant 0 : index
    %20 = vector.load %arg3[%c0_15, %c0_16, %c0_17] : memref<4x128x128xf32, #tpu.memory_space<vmem>>, vector<1x128x128xf32>
    %21 = vector.shape_cast %20 : vector<1x128x128xf32> to vector<128x128xf32>
    %cst_18 = arith.constant dense<0.000000e+00> : vector<8x128xf32>
    %22 = tpu.matmul %19, %21, %cst_18 {dimension_numbers = #tpu.dot_dimension_numbers<[1], [0], [0], [1], [0, 0, 1, 1], [], []>} : vector<8x128xf32>, vector<128x128xf32>, vector<8x128xf32> -> vector<8x128xf32>
    %c0_19 = arith.constant 0 : index
    %c0_20 = arith.constant 0 : index
    %c0_21 = arith.constant 0 : index
    %23 = vector.load %arg4[%c0_19, %c0_20, %c0_21] : memref<4x1x128xf32, #tpu.memory_space<vmem>>, vector<1x1x128xf32>
    %24 = vector.shape_cast %23 : vector<1x1x128xf32> to vector<1x128xf32>
    %25 = vector.broadcast %24 : vector<1x128xf32> to vector<8x128xf32>
    %26 = arith.addf %22, %25 : vector<8x128xf32>
    %cst_22 = arith.constant 0.000000e+00 : f32
    %27 = vector.broadcast %cst_22 : f32 to vector<8x128xf32>
    %28 = arith.maximumf %26, %27 : vector<8x128xf32>
    %c1_23 = arith.constant 1 : index
    %c0_24 = arith.constant 0 : index
    %c0_25 = arith.constant 0 : index
    %29 = vector.load %arg3[%c1_23, %c0_24, %c0_25] : memref<4x128x128xf32, #tpu.memory_space<vmem>>, vector<1x128x128xf32>
    %30 = vector.shape_cast %29 : vector<1x128x128xf32> to vector<128x128xf32>
    %cst_26 = arith.constant dense<0.000000e+00> : vector<8x128xf32>
    %31 = tpu.matmul %28, %30, %cst_26 {dimension_numbers = #tpu.dot_dimension_numbers<[1], [0], [0], [1], [0, 0, 1, 1], [], []>} : vector<8x128xf32>, vector<128x128xf32>, vector<8x128xf32> -> vector<8x128xf32>
    %c1_27 = arith.constant 1 : index
    %c0_28 = arith.constant 0 : index
    %c0_29 = arith.constant 0 : index
    %32 = vector.load %arg4[%c1_27, %c0_28, %c0_29] : memref<4x1x128xf32, #tpu.memory_space<vmem>>, vector<1x1x128xf32>
    %33 = vector.shape_cast %32 : vector<1x1x128xf32> to vector<1x128xf32>
    %34 = vector.broadcast %33 : vector<1x128xf32> to vector<8x128xf32>
    %35 = arith.addf %31, %34 : vector<8x128xf32>
    %cst_30 = arith.constant 0.000000e+00 : f32
    %36 = vector.broadcast %cst_30 : f32 to vector<8x128xf32>
    %37 = arith.maximumf %35, %36 : vector<8x128xf32>
    %c2 = arith.constant 2 : index
    %c0_31 = arith.constant 0 : index
    %c0_32 = arith.constant 0 : index
    %38 = vector.load %arg3[%c2, %c0_31, %c0_32] : memref<4x128x128xf32, #tpu.memory_space<vmem>>, vector<1x128x128xf32>
    %39 = vector.shape_cast %38 : vector<1x128x128xf32> to vector<128x128xf32>
    %cst_33 = arith.constant dense<0.000000e+00> : vector<8x128xf32>
    %40 = tpu.matmul %37, %39, %cst_33 {dimension_numbers = #tpu.dot_dimension_numbers<[1], [0], [0], [1], [0, 0, 1, 1], [], []>} : vector<8x128xf32>, vector<128x128xf32>, vector<8x128xf32> -> vector<8x128xf32>
    %c2_34 = arith.constant 2 : index
    %c0_35 = arith.constant 0 : index
    %c0_36 = arith.constant 0 : index
    %41 = vector.load %arg4[%c2_34, %c0_35, %c0_36] : memref<4x1x128xf32, #tpu.memory_space<vmem>>, vector<1x1x128xf32>
    %42 = vector.shape_cast %41 : vector<1x1x128xf32> to vector<1x128xf32>
    %43 = vector.broadcast %42 : vector<1x128xf32> to vector<8x128xf32>
    %44 = arith.addf %40, %43 : vector<8x128xf32>
    %cst_37 = arith.constant 0.000000e+00 : f32
    %45 = vector.broadcast %cst_37 : f32 to vector<8x128xf32>
    %46 = arith.maximumf %44, %45 : vector<8x128xf32>
    %c3 = arith.constant 3 : index
    %c0_38 = arith.constant 0 : index
    %c0_39 = arith.constant 0 : index
    %47 = vector.load %arg3[%c3, %c0_38, %c0_39] : memref<4x128x128xf32, #tpu.memory_space<vmem>>, vector<1x128x128xf32>
    %48 = vector.shape_cast %47 : vector<1x128x128xf32> to vector<128x128xf32>
    %cst_40 = arith.constant dense<0.000000e+00> : vector<8x128xf32>
    %49 = tpu.matmul %46, %48, %cst_40 {dimension_numbers = #tpu.dot_dimension_numbers<[1], [0], [0], [1], [0, 0, 1, 1], [], []>} : vector<8x128xf32>, vector<128x128xf32>, vector<8x128xf32> -> vector<8x128xf32>
    %c3_41 = arith.constant 3 : index
    %c0_42 = arith.constant 0 : index
    %c0_43 = arith.constant 0 : index
    %50 = vector.load %arg4[%c3_41, %c0_42, %c0_43] : memref<4x1x128xf32, #tpu.memory_space<vmem>>, vector<1x1x128xf32>
    %51 = vector.shape_cast %50 : vector<1x1x128xf32> to vector<1x128xf32>
    %52 = vector.broadcast %51 : vector<1x128xf32> to vector<8x128xf32>
    %53 = arith.addf %49, %52 : vector<8x128xf32>
    %cst_44 = arith.constant 0.000000e+00 : f32
    %54 = vector.broadcast %cst_44 : f32 to vector<8x128xf32>
    %55 = arith.maximumf %53, %54 : vector<8x128xf32>
    %c0_45 = arith.constant 0 : index
    %c0_46 = arith.constant 0 : index
    %56 = vector.load %arg5[%c0_45, %c0_46] : memref<8x128xf32, #tpu.memory_space<vmem>>, vector<8x128xf32>
    tpu.vector_store %arg5[%c0_45, %c0_46], %55 {strides = array<i32>} : memref<8x128xf32, #tpu.memory_space<vmem>>, vector<8x128xf32>,
    return
  }
}

</mosaic_0001>

<llo_original>
// kernel: mlp_forward.1
$region0: #{mlp_forward.1}
  #allocation0 [shape = 'u32[]', space=smem, size = 0x4, offset = 0x4, fixed_abs, tag = 'smem constant byte address 0x4 - core index']
  #allocation1 [shape = 'u32[72,128]{1,0:T(1,128)}', space=vmem, size = 0x9000, scoped, tag = 'internal scratch']
  %s0 = inlined_call_operand.vmem [shape: f32[8,256], index: 0, kind: input, shape index: {}]
  %s1 = inlined_call_operand.hbm [shape: f32[2,256,256], index: 1, kind: input, shape index: {}]
  %s2 = inlined_call_operand.vmem [shape: f32[2,1,256], index: 2, kind: input, shape index: {}]
  %s3 = inlined_call_operand.hbm [shape: f32[4,128,128], index: 3, kind: input, shape index: {}]
  %s4 = inlined_call_operand.vmem [shape: f32[4,1,128], index: 4, kind: input, shape index: {}]
  %s5 = inlined_call_operand.vmem [shape: f32[8,128], index: 5, kind: output, shape index: {}]
  %s6 = sld [smem:[#allocation0]]
  $region38: #{mlp_forward.1} parent=0
    _
  %s8 = ssub.s32 1, %s6
  %s9 = scalar_select 0, %s8, %s6
  $region1: #{mlp_forward.1} parent=0
    #allocation2 [shape = 'u8[524288]{0}', space=vmem, size = 0x80000, scoped, tag = 'input window, operand 1, single buffered']
    #allocation3 [shape = 's32[1]{0}', space=sflag, size = 0x4, scoped, tag = 'scoped memory for mlp_forward.1']
    #allocation4 [shape = 'u8[262144]{0}', space=vmem, size = 0x40000, scoped, tag = 'input window, operand 3, single buffered']
    #allocation5 [shape = 's32[1]{0}', space=sflag, size = 0x4, scoped, tag = 'scoped memory for mlp_forward.1']
    %10 = vsyncpa [#allocation3], 0
    %11 = vsyncpa [#allocation5], 0
    // Predicated region
    $region2: #{mlp_forward.1} parent=1 // pred_check
      _
    $region3: #{mlp_forward.1} parent=1 // pred_check_branch
      %13 = sbr.rel (0) target = $region5
    $region4: #{mlp_forward.1} parent=1 // pred_region
      _
    $region5: #{mlp_forward.1} parent=1 // pred_fallthru
      _
    // Predicated region
    $region6: #{mlp_forward.1} parent=1 // pred_check
      _
    $region7: #{mlp_forward.1} parent=1 // pred_check_branch
      %15 = sbr.rel (0) target = $region9
    $region8: #{mlp_forward.1} parent=1 // pred_region
      %17 = vsyncadd [#allocation3], 0
      %s18 = sshll.u32 %s1, 4
      %s19 = int_to_ptr.hbm [resolvable:$true] %s18
      %s20 = sshll.u32 [#allocation2], 4
      %s21 = int_to_ptr.vmem [resolvable:$true] %s20
      %26 = dma.hbm_to_vmem [thread:$0]  %s19, 16384, %s21, [#allocation3], 256, 256, 16
    $region9: #{mlp_forward.1} parent=1 // pred_fallthru
      _
    // Predicated region
    $region10: #{mlp_forward.1} parent=1 // pred_check
      _
    $region11: #{mlp_forward.1} parent=1 // pred_check_branch
      %28 = sbr.rel (0) target = $region13
    $region12: #{mlp_forward.1} parent=1 // pred_region
      _
    $region13: #{mlp_forward.1} parent=1 // pred_fallthru
      _
    // Predicated region
    $region14: #{mlp_forward.1} parent=1 // pred_check
      _
    $region15: #{mlp_forward.1} parent=1 // pred_check_branch
      %30 = sbr.rel (0) target = $region17
    $region16: #{mlp_forward.1} parent=1 // pred_region
      %32 = vsyncadd [#allocation5], 0
      %s33 = sshll.u32 %s3, 4
      %s34 = int_to_ptr.hbm [resolvable:$true] %s33
      %s35 = sshll.u32 [#allocation4], 4
      %s36 = int_to_ptr.vmem [resolvable:$true] %s35
      %41 = dma.hbm_to_vmem [thread:$0]  %s34, 8192, %s36, [#allocation5], 128, 128, 8
    $region17: #{mlp_forward.1} parent=1 // pred_fallthru
      _
    // Predicated region
    $region18: #{mlp_forward.1} parent=1 // pred_check
      _
    $region19: #{mlp_forward.1} parent=1 // pred_check_branch
      %43 = sbr.rel (0) target = $region21
    $region20: #{mlp_forward.1} parent=1 // pred_region
      _
    $region21: #{mlp_forward.1} parent=1 // pred_fallthru
      _
    // Predicated region
    $region22: #{mlp_forward.1} parent=1 // pred_check
      _
    $region23: #{mlp_forward.1} parent=1 // pred_check_branch
      %45 = sbr.rel (0) target = $region25
    $region24: #{mlp_forward.1} parent=1 // pred_region
      %47 = dma.done [#allocation3], 16384
    $region25: #{mlp_forward.1} parent=1 // pred_fallthru
      _
    // Predicated region
    $region26: #{mlp_forward.1} parent=1 // pred_check
      _
    $region27: #{mlp_forward.1} parent=1 // pred_check_branch
      %49 = sbr.rel (0) target = $region29
    $region28: #{mlp_forward.1} parent=1 // pred_region
      %51 = dma.done [#allocation5], 8192
    $region29: #{mlp_forward.1} parent=1 // pred_fallthru
      _
    %v52 = vld [vmem:[%s0] sm:$0xff]
    %v53 = vld [vmem:[%s0 + $0x8] sm:$0xff]
    %v54 = vld [vmem:[#allocation2] sm:$0xff]
    %v55 = vld [vmem:[#allocation2 + $0x8] sm:$0xff]
    %v56 = vld [vmem:[#allocation2 + $0x10] sm:$0xff]
    %v57 = vld [vmem:[#allocation2 + $0x18] sm:$0xff]
    %v58 = vld [vmem:[#allocation2 + $0x20] sm:$0xff]
    %v59 = vld [vmem:[#allocation2 + $0x28] sm:$0xff]
    %v60 = vld [vmem:[#allocation2 + $0x30] sm:$0xff]
    %v61 = vld [vmem:[#allocation2 + $0x38] sm:$0xff]
    %v62 = vld [vmem:[#allocation2 + $0x40] sm:$0xff]
    %v63 = vld [vmem:[#allocation2 + $0x48] sm:$0xff]
    %v64 = vld [vmem:[#allocation2 + $0x50] sm:$0xff]
    %v65 = vld [vmem:[#allocation2 + $0x58] sm:$0xff]
    %v66 = vld [vmem:[#allocation2 + $0x60] sm:$0xff]
    %v67 = vld [vmem:[#allocation2 + $0x68] sm:$0xff]
    %v68 = vld [vmem:[#allocation2 + $0x70] sm:$0xff]
    %v69 = vld [vmem:[#allocation2 + $0x78] sm:$0xff]
    %v70 = vld [vmem:[#allocation2 + $0x80] sm:$0xff]
    %v71 = vld [vmem:[#allocation2 + $0x88] sm:$0xff]
    %v72 = vld [vmem:[#allocation2 + $0x90] sm:$0xff]
    %v73 = vld [vmem:[#allocation2 + $0x98] sm:$0xff]
    %v74 = vld [vmem:[#allocation2 + $0xa0] sm:$0xff]
    %v75 = vld [vmem:[#allocation2 + $0xa8] sm:$0xff]
    %v76 = vld [vmem:[#allocation2 + $0xb0] sm:$0xff]
    %v77 = vld [vmem:[#allocation2 + $0xb8] sm:$0xff]
    %v78 = vld [vmem:[#allocation2 + $0xc0] sm:$0xff]
    %v79 = vld [vmem:[#allocation2 + $0xc8] sm:$0xff]
    %v80 = vld [vmem:[#allocation2 + $0xd0] sm:$0xff]
    %v81 = vld [vmem:[#allocation2 + $0xd8] sm:$0xff]
    %v82 = vld [vmem:[#allocation2 + $0xe0] sm:$0xff]
    %v83 = vld [vmem:[#allocation2 + $0xe8] sm:$0xff]
    %v84 = vld [vmem:[#allocation2 + $0xf0] sm:$0xff]
    %v85 = vld [vmem:[#allocation2 + $0xf8] sm:$0xff]
    %v86 = vld [vmem:[#allocation2 + $0x100] sm:$0xff]
    %v87 = vld [vmem:[#allocation2 + $0x108] sm:$0xff]
    %v88 = vld [vmem:[#allocation2 + $0x110] sm:$0xff]
    %v89 = vld [vmem:[#allocation2 + $0x118] sm:$0xff]
    %v90 = vld [vmem:[#allocation2 + $0x120] sm:$0xff]
    %v91 = vld [vmem:[#allocation2 + $0x128] sm:$0xff]
    %v92 = vld [vmem:[#allocation2 + $0x130] sm:$0xff]
    %v93 = vld [vmem:[#allocation2 + $0x138] sm:$0xff]
    %v94 = vld [vmem:[#allocation2 + $0x140] sm:$0xff]
    %v95 = vld [vmem:[#allocation2 + $0x148] sm:$0xff]
    %v96 = vld [vmem:[#allocation2 + $0x150] sm:$0xff]
    %v97 = vld [vmem:[#allocation2 + $0x158] sm:$0xff]
    %v98 = vld [vmem:[#allocation2 + $0x160] sm:$0xff]
    %v99 = vld [vmem:[#allocation2 + $0x168] sm:$0xff]
    %v100 = vld [vmem:[#allocation2 + $0x170] sm:$0xff]
    %v101 = vld [vmem:[#allocation2 + $0x178] sm:$0xff]
    %v102 = vld [vmem:[#allocation2 + $0x180] sm:$0xff]
    %v103 = vld [vmem:[#allocation2 + $0x188] sm:$0xff]
    %v104 = vld [vmem:[#allocation2 + $0x190] sm:$0xff]
    %v105 = vld [vmem:[#allocation2 + $0x198] sm:$0xff]
    %v106 = vld [vmem:[#allocation2 + $0x1a0] sm:$0xff]
    %v107 = vld [vmem:[#allocation2 + $0x1a8] sm:$0xff]
    %v108 = vld [vmem:[#allocation2 + $0x1b0] sm:$0xff]
    %v109 = vld [vmem:[#allocation2 + $0x1b8] sm:$0xff]
    %v110 = vld [vmem:[#allocation2 + $0x1c0] sm:$0xff]
    %v111 = vld [vmem:[#allocation2 + $0x1c8] sm:$0xff]
    %v112 = vld [vmem:[#allocation2 + $0x1d0] sm:$0xff]
    %v113 = vld [vmem:[#allocation2 + $0x1d8] sm:$0xff]
    %v114 = vld [vmem:[#allocation2 + $0x1e0] sm:$0xff]
    %v115 = vld [vmem:[#allocation2 + $0x1e8] sm:$0xff]
    %v116 = vld [vmem:[#allocation2 + $0x1f0] sm:$0xff]
    %v117 = vld [vmem:[#allocation2 + $0x1f8] sm:$0xff]
    %v118 = vld [vmem:[%s2] sm:$0x3]
    %v120 = vperm.slane %v118, 0
    %v121 = vperm.slane %v118, 1
    %124 = vmatpush.msra.mxu0 %v84
    %125 = vmatpush.msra.mxu0 %v82
    %126 = vmatpush.msra.mxu0 %v80
    %127 = vmatpush.msra.mxu0 %v78
    %128 = vmatpush.msra.mxu0 %v76
    %129 = vmatpush.msra.mxu0 %v74
    %130 = vmatpush.msra.mxu0 %v72
    %131 = vmatpush.msra.mxu0 %v70
    %132 = vmatpush.msra.mxu0 %v68
    %133 = vmatpush.msra.mxu0 %v66
    %134 = vmatpush.msra.mxu0 %v64
    %135 = vmatpush.msra.mxu0 %v62
    %136 = vmatpush.msra.mxu0 %v60
    %137 = vmatpush.msra.mxu0 %v58
    %138 = vmatpush.msra.mxu0 %v56
    %139 = vmatpush.msra.mxu0 %v54
    %140 = vmatmul.f32.gmra.mxu0 %v52
    %v141 = vpop.f32.mrf.mxu0
    %v142 = vadd.f32 %v120, %v141
    %143 = vdwg.mxu0
    %144 = vmatpush.msra.mxu0 %v116
    %145 = vmatpush.msra.mxu0 %v114
    %146 = vmatpush.msra.mxu0 %v112
    %147 = vmatpush.msra.mxu0 %v110
    %148 = vmatpush.msra.mxu0 %v108
    %149 = vmatpush.msra.mxu0 %v106
    %150 = vmatpush.msra.mxu0 %v104
    %151 = vmatpush.msra.mxu0 %v102
    %152 = vmatpush.msra.mxu0 %v100
    %153 = vmatpush.msra.mxu0 %v98
    %154 = vmatpush.msra.mxu0 %v96
    %155 = vmatpush.msra.mxu0 %v94
    %156 = vmatpush.msra.mxu0 %v92
    %157 = vmatpush.msra.mxu0 %v90
    %158 = vmatpush.msra.mxu0 %v88
    %159 = vmatpush.msra.mxu0 %v86
    %160 = vmatmul.f32.gmra.mxu0 %v53
    %v161 = vpop.f32.mrf.mxu0
    %v162 = vadd.f32 %v142, %v161
    %163 = vdwg.mxu0
    %164 = vmatpush.msra.mxu0 %v85
    %165 = vmatpush.msra.mxu0 %v83
    %166 = vmatpush.msra.mxu0 %v81
    %167 = vmatpush.msra.mxu0 %v79
    %168 = vmatpush.msra.mxu0 %v77
    %169 = vmatpush.msra.mxu0 %v75
    %170 = vmatpush.msra.mxu0 %v73
    %171 = vmatpush.msra.mxu0 %v71
    %172 = vmatpush.msra.mxu0 %v69
    %173 = vmatpush.msra.mxu0 %v67
    %174 = vmatpush.msra.mxu0 %v65
    %175 = vmatpush.msra.mxu0 %v63
    %176 = vmatpush.msra.mxu0 %v61
    %177 = vmatpush.msra.mxu0 %v59
    %178 = vmatpush.msra.mxu0 %v57
    %179 = vmatpush.msra.mxu0 %v55
    %180 = vmatmul.f32.gmra.mxu0 %v52
    %v181 = vpop.f32.mrf.mxu0
    %v182 = vadd.f32 %v121, %v181
    %183 = vdwg.mxu0
    %184 = vmatpush.msra.mxu0 %v117
    %185 = vmatpush.msra.mxu0 %v115
    %186 = vmatpush.msra.mxu0 %v113
    %187 = vmatpush.msra.mxu0 %v111
    %188 = vmatpush.msra.mxu0 %v109
    %189 = vmatpush.msra.mxu0 %v107
    %190 = vmatpush.msra.mxu0 %v105
    %191 = vmatpush.msra.mxu0 %v103
    %192 = vmatpush.msra.mxu0 %v101
    %193 = vmatpush.msra.mxu0 %v99
    %194 = vmatpush.msra.mxu0 %v97
    %195 = vmatpush.msra.mxu0 %v95
    %196 = vmatpush.msra.mxu0 %v93
    %197 = vmatpush.msra.mxu0 %v91
    %198 = vmatpush.msra.mxu0 %v89
    %199 = vmatpush.msra.mxu0 %v87
    %200 = vmatmul.f32.gmra.mxu0 %v53
    %v201 = vpop.f32.mrf.mxu0
    %v202 = vadd.f32 %v182, %v201
    %203 = vdwg.mxu0
    %v204 = vmax.f32 %v162, 0.0
    %v205 = vmax.f32 %v202, 0.0
    %s206 = scalar_lea.vmem [#allocation2], 512
    %v207 = vld [vmem:[%s206] sm:$0xff]
    %v208 = vld [vmem:[%s206 + $0x10] sm:$0xff]
    %v209 = vld [vmem:[%s206 + $0x20] sm:$0xff]
    %v210 = vld [vmem:[%s206 + $0x30] sm:$0xff]
    %v211 = vld [vmem:[%s206 + $0x40] sm:$0xff]
    %v212 = vld [vmem:[%s206 + $0x50] sm:$0xff]
    %v213 = vld [vmem:[%s206 + $0x60] sm:$0xff]
    %v214 = vld [vmem:[%s206 + $0x70] sm:$0xff]
    %v215 = vld [vmem:[%s206 + $0x80] sm:$0xff]
    %v216 = vld [vmem:[%s206 + $0x90] sm:$0xff]
    %v217 = vld [vmem:[%s206 + $0xa0] sm:$0xff]
    %v218 = vld [vmem:[%s206 + $0xb0] sm:$0xff]
    %v219 = vld [vmem:[%s206 + $0xc0] sm:$0xff]
    %v220 = vld [vmem:[%s206 + $0xd0] sm:$0xff]
    %v221 = vld [vmem:[%s206 + $0xe0] sm:$0xff]
    %v222 = vld [vmem:[%s206 + $0xf0] sm:$0xff]
    %v223 = vld [vmem:[%s206 + $0x100] sm:$0xff]
    %v224 = vld [vmem:[%s206 + $0x110] sm:$0xff]
    %v225 = vld [vmem:[%s206 + $0x120] sm:$0xff]
    %v226 = vld [vmem:[%s206 + $0x130] sm:$0xff]
    %v227 = vld [vmem:[%s206 + $0x140] sm:$0xff]
    %v228 = vld [vmem:[%s206 + $0x150] sm:$0xff]
    %v229 = vld [vmem:[%s206 + $0x160] sm:$0xff]
    %v230 = vld [vmem:[%s206 + $0x170] sm:$0xff]
    %v231 = vld [vmem:[%s206 + $0x180] sm:$0xff]
    %v232 = vld [vmem:[%s206 + $0x190] sm:$0xff]
    %v233 = vld [vmem:[%s206 + $0x1a0] sm:$0xff]
    %v234 = vld [vmem:[%s206 + $0x1b0] sm:$0xff]
    %v235 = vld [vmem:[%s206 + $0x1c0] sm:$0xff]
    %v236 = vld [vmem:[%s206 + $0x1d0] sm:$0xff]
    %v237 = vld [vmem:[%s206 + $0x1e0] sm:$0xff]
    %v238 = vld [vmem:[%s206 + $0x1f0] sm:$0xff]
    %s239 = scalar_lea.vmem %s2, 2
    %v240 = vld [vmem:[%s239] sm:$0x3]
    %v242 = vperm.slane %v240, 0
    %244 = vmatpush.msra.mxu0 %v222
    %245 = vmatpush.msra.mxu0 %v221
    %246 = vmatpush.msra.mxu0 %v220
    %247 = vmatpush.msra.mxu0 %v219
    %248 = vmatpush.msra.mxu0 %v218
    %249 = vmatpush.msra.mxu0 %v217
    %250 = vmatpush.msra.mxu0 %v216
    %251 = vmatpush.msra.mxu0 %v215
    %252 = vmatpush.msra.mxu0 %v214
    %253 = vmatpush.msra.mxu0 %v213
    %254 = vmatpush.msra.mxu0 %v212
    %255 = vmatpush.msra.mxu0 %v211
    %256 = vmatpush.msra.mxu0 %v210
    %257 = vmatpush.msra.mxu0 %v209
    %258 = vmatpush.msra.mxu0 %v208
    %259 = vmatpush.msra.mxu0 %v207
    %260 = vmatmul.f32.gmra.mxu0 %v204
    %v261 = vpop.f32.mrf.mxu0
    %v262 = vadd.f32 %v242, %v261
    %263 = vdwg.mxu0
    %264 = vmatpush.msra.mxu0 %v238
    %265 = vmatpush.msra.mxu0 %v237
    %266 = vmatpush.msra.mxu0 %v236
    %267 = vmatpush.msra.mxu0 %v235
    %268 = vmatpush.msra.mxu0 %v234
    %269 = vmatpush.msra.mxu0 %v233
    %270 = vmatpush.msra.mxu0 %v232
    %271 = vmatpush.msra.mxu0 %v231
    %272 = vmatpush.msra.mxu0 %v230
    %273 = vmatpush.msra.mxu0 %v229
    %274 = vmatpush.msra.mxu0 %v228
    %275 = vmatpush.msra.mxu0 %v227
    %276 = vmatpush.msra.mxu0 %v226
    %277 = vmatpush.msra.mxu0 %v225
    %278 = vmatpush.msra.mxu0 %v224
    %279 = vmatpush.msra.mxu0 %v223
    %280 = vmatmul.f32.gmra.mxu0 %v205
    %v281 = vpop.f32.mrf.mxu0
    %v282 = vadd.f32 %v262, %v281
    %283 = vdwg.mxu0
    %v284 = vmax.f32 %v282, 0.0
    %v285 = vld [vmem:[#allocation4] sm:$0xff]
    %v286 = vld [vmem:[#allocation4 + $0x8] sm:$0xff]
    %v287 = vld [vmem:[#allocation4 + $0x10] sm:$0xff]
    %v288 = vld [vmem:[#allocation4 + $0x18] sm:$0xff]
    %v289 = vld [vmem:[#allocation4 + $0x20] sm:$0xff]
    %v290 = vld [vmem:[#allocation4 + $0x28] sm:$0xff]
    %v291 = vld [vmem:[#allocation4 + $0x30] sm:$0xff]
    %v292 = vld [vmem:[#allocation4 + $0x38] sm:$0xff]
    %v293 = vld [vmem:[#allocation4 + $0x40] sm:$0xff]
    %v294 = vld [vmem:[#allocation4 + $0x48] sm:$0xff]
    %v295 = vld [vmem:[#allocation4 + $0x50] sm:$0xff]
    %v296 = vld [vmem:[#allocation4 + $0x58] sm:$0xff]
    %v297 = vld [vmem:[#allocation4 + $0x60] sm:$0xff]
    %v298 = vld [vmem:[#allocation4 + $0x68] sm:$0xff]
    %v299 = vld [vmem:[#allocation4 + $0x70] sm:$0xff]
    %v300 = vld [vmem:[#allocation4 + $0x78] sm:$0xff]
    %v301 = vld [vmem:[%s4] sm:$0x1]
    %v303 = vperm.slane %v301, 0
    %305 = vmatpush.msra.mxu0 %v300
    %306 = vmatpush.msra.mxu0 %v299
    %307 = vmatpush.msra.mxu0 %v298
    %308 = vmatpush.msra.mxu0 %v297
    %309 = vmatpush.msra.mxu0 %v296
    %310 = vmatpush.msra.mxu0 %v295
    %311 = vmatpush.msra.mxu0 %v294
    %312 = vmatpush.msra.mxu0 %v293
    %313 = vmatpush.msra.mxu0 %v292
    %314 = vmatpush.msra.mxu0 %v291
    %315 = vmatpush.msra.mxu0 %v290
    %316 = vmatpush.msra.mxu0 %v289
    %317 = vmatpush.msra.mxu0 %v288
    %318 = vmatpush.msra.mxu0 %v287
    %319 = vmatpush.msra.mxu0 %v286
    %320 = vmatpush.msra.mxu0 %v285
    %321 = vmatmul.f32.gmra.mxu0 %v284
    %v322 = vpop.f32.mrf.mxu0
    %v323 = vadd.f32 %v303, %v322
    %324 = vdwg.mxu0
    %v325 = vmax.f32 %v323, 0.0
    %s326 = scalar_lea.vmem [#allocation4], 128
    %v327 = vld [vmem:[%s326] sm:$0xff]
    %v328 = vld [vmem:[%s326 + $0x8] sm:$0xff]
    %v329 = vld [vmem:[%s326 + $0x10] sm:$0xff]
    %v330 = vld [vmem:[%s326 + $0x18] sm:$0xff]
    %v331 = vld [vmem:[%s326 + $0x20] sm:$0xff]
    %v332 = vld [vmem:[%s326 + $0x28] sm:$0xff]
    %v333 = vld [vmem:[%s326 + $0x30] sm:$0xff]
    %v334 = vld [vmem:[%s326 + $0x38] sm:$0xff]
    %v335 = vld [vmem:[%s326 + $0x40] sm:$0xff]
    %v336 = vld [vmem:[%s326 + $0x48] sm:$0xff]
    %v337 = vld [vmem:[%s326 + $0x50] sm:$0xff]
    %v338 = vld [vmem:[%s326 + $0x58] sm:$0xff]
    %v339 = vld [vmem:[%s326 + $0x60] sm:$0xff]
    %v340 = vld [vmem:[%s326 + $0x68] sm:$0xff]
    %v341 = vld [vmem:[%s326 + $0x70] sm:$0xff]
    %v342 = vld [vmem:[%s326 + $0x78] sm:$0xff]
    %s343 = scalar_lea.vmem %s4, 1
    %v344 = vld [vmem:[%s343] sm:$0x1]
    %v346 = vperm.slane %v344, 0
    %348 = vmatpush.msra.mxu0 %v342
    %349 = vmatpush.msra.mxu0 %v341
    %350 = vmatpush.msra.mxu0 %v340
    %351 = vmatpush.msra.mxu0 %v339
    %352 = vmatpush.msra.mxu0 %v338
    %353 = vmatpush.msra.mxu0 %v337
    %354 = vmatpush.msra.mxu0 %v336
    %355 = vmatpush.msra.mxu0 %v335
    %356 = vmatpush.msra.mxu0 %v334
    %357 = vmatpush.msra.mxu0 %v333
    %358 = vmatpush.msra.mxu0 %v332
    %359 = vmatpush.msra.mxu0 %v331
    %360 = vmatpush.msra.mxu0 %v330
    %361 = vmatpush.msra.mxu0 %v329
    %362 = vmatpush.msra.mxu0 %v328
    %363 = vmatpush.msra.mxu0 %v327
    %364 = vmatmul.f32.gmra.mxu0 %v325
    %v365 = vpop.f32.mrf.mxu0
    %v366 = vadd.f32 %v346, %v365
    %367 = vdwg.mxu0
    %v368 = vmax.f32 %v366, 0.0
    %s369 = scalar_lea.vmem [#allocation4], 256
    %v370 = vld [vmem:[%s369] sm:$0xff]
    %v371 = vld [vmem:[%s369 + $0x8] sm:$0xff]
    %v372 = vld [vmem:[%s369 + $0x10] sm:$0xff]
    %v373 = vld [vmem:[%s369 + $0x18] sm:$0xff]
    %v374 = vld [vmem:[%s369 + $0x20] sm:$0xff]
    %v375 = vld [vmem:[%s369 + $0x28] sm:$0xff]
    %v376 = vld [vmem:[%s369 + $0x30] sm:$0xff]
    %v377 = vld [vmem:[%s369 + $0x38] sm:$0xff]
    %v378 = vld [vmem:[%s369 + $0x40] sm:$0xff]
    %v379 = vld [vmem:[%s369 + $0x48] sm:$0xff]
    %v380 = vld [vmem:[%s369 + $0x50] sm:$0xff]
    %v381 = vld [vmem:[%s369 + $0x58] sm:$0xff]
    %v382 = vld [vmem:[%s369 + $0x60] sm:$0xff]
    %v383 = vld [vmem:[%s369 + $0x68] sm:$0xff]
    %v384 = vld [vmem:[%s369 + $0x70] sm:$0xff]
    %v385 = vld [vmem:[%s369 + $0x78] sm:$0xff]
    %s386 = scalar_lea.vmem %s4, 2
    %v387 = vld [vmem:[%s386] sm:$0x1]
    %v389 = vperm.slane %v387, 0
    %391 = vmatpush.msra.mxu0 %v385
    %392 = vmatpush.msra.mxu0 %v384
    %393 = vmatpush.msra.mxu0 %v383
    %394 = vmatpush.msra.mxu0 %v382
    %395 = vmatpush.msra.mxu0 %v381
    %396 = vmatpush.msra.mxu0 %v380
    %397 = vmatpush.msra.mxu0 %v379
    %398 = vmatpush.msra.mxu0 %v378
    %399 = vmatpush.msra.mxu0 %v377
    %400 = vmatpush.msra.mxu0 %v376
    %401 = vmatpush.msra.mxu0 %v375
    %402 = vmatpush.msra.mxu0 %v374
    %403 = vmatpush.msra.mxu0 %v373
    %404 = vmatpush.msra.mxu0 %v372
    %405 = vmatpush.msra.mxu0 %v371
    %406 = vmatpush.msra.mxu0 %v370
    %407 = vmatmul.f32.gmra.mxu0 %v368
    %v408 = vpop.f32.mrf.mxu0
    %v409 = vadd.f32 %v389, %v408
    %410 = vdwg.mxu0
    %v411 = vmax.f32 %v409, 0.0
    %s412 = scalar_lea.vmem [#allocation4], 384
    %v413 = vld [vmem:[%s412] sm:$0xff]
    %v414 = vld [vmem:[%s412 + $0x8] sm:$0xff]
    %v415 = vld [vmem:[%s412 + $0x10] sm:$0xff]
    %v416 = vld [vmem:[%s412 + $0x18] sm:$0xff]
    %v417 = vld [vmem:[%s412 + $0x20] sm:$0xff]
    %v418 = vld [vmem:[%s412 + $0x28] sm:$0xff]
    %v419 = vld [vmem:[%s412 + $0x30] sm:$0xff]
    %v420 = vld [vmem:[%s412 + $0x38] sm:$0xff]
    %v421 = vld [vmem:[%s412 + $0x40] sm:$0xff]
    %v422 = vld [vmem:[%s412 + $0x48] sm:$0xff]
    %v423 = vld [vmem:[%s412 + $0x50] sm:$0xff]
    %v424 = vld [vmem:[%s412 + $0x58] sm:$0xff]
    %v425 = vld [vmem:[%s412 + $0x60] sm:$0xff]
    %v426 = vld [vmem:[%s412 + $0x68] sm:$0xff]
    %v427 = vld [vmem:[%s412 + $0x70] sm:$0xff]
    %v428 = vld [vmem:[%s412 + $0x78] sm:$0xff]
    %s429 = scalar_lea.vmem %s4, 3
    %v430 = vld [vmem:[%s429] sm:$0x1]
    %v432 = vperm.slane %v430, 0
    %434 = vmatpush.msra.mxu0 %v428
    %435 = vmatpush.msra.mxu0 %v427
    %436 = vmatpush.msra.mxu0 %v426
    %437 = vmatpush.msra.mxu0 %v425
    %438 = vmatpush.msra.mxu0 %v424
    %439 = vmatpush.msra.mxu0 %v423
    %440 = vmatpush.msra.mxu0 %v422
    %441 = vmatpush.msra.mxu0 %v421
    %442 = vmatpush.msra.mxu0 %v420
    %443 = vmatpush.msra.mxu0 %v419
    %444 = vmatpush.msra.mxu0 %v418
    %445 = vmatpush.msra.mxu0 %v417
    %446 = vmatpush.msra.mxu0 %v416
    %447 = vmatpush.msra.mxu0 %v415
    %448 = vmatpush.msra.mxu0 %v414
    %449 = vmatpush.msra.mxu0 %v413
    %450 = vmatmul.f32.gmra.mxu0 %v411
    %v451 = vpop.f32.mrf.mxu0
    %v452 = vadd.f32 %v432, %v451
    %453 = vdwg.mxu0
    %v454 = vmax.f32 %v452, 0.0
    %455 = vst [vmem:[%s5] sm:$0xff] %v454
    // Predicated region
    $region30: #{mlp_forward.1} parent=1 // pred_check
      _
    $region31: #{mlp_forward.1} parent=1 // pred_check_branch
      %457 = sbr.rel (0) target = $region33
    $region32: #{mlp_forward.1} parent=1 // pred_region
      _
    $region33: #{mlp_forward.1} parent=1 // pred_fallthru
      _
    // Predicated region
    $region34: #{mlp_forward.1} parent=1 // pred_check
      _
    $region35: #{mlp_forward.1} parent=1 // pred_check_branch
      %459 = sbr.rel (0) target = $region37
    $region36: #{mlp_forward.1} parent=1 // pred_region
      _
    $region37: #{mlp_forward.1} parent=1 // pred_fallthru
      _
    %460 = vsyncpa [#allocation3], 1
    %461 = vsyncpa [#allocation5], 1

</llo_original>
